<compile_context>
chip_gen: v7x
topology: tpu7x:2x2x1
jax: 0.10.0
libtpu: 0.0.40
codegen_flags: <defaults>
</compile_context>

<pallas_src>
import functools

import jax
import jax.numpy as jnp
import numpy as np
from jax.experimental import pallas as pl
from jax.experimental.pallas import tpu as pltpu

EPS = 1e-5


# ---------------------------------------------------------------------------
# Fused kernel:
#   BN_in -> ReLU -> ConvTranspose1d(k=3,s=2,p=1,op=1) -> BN_out -> ReLU
#          -> [ResidualBlock as written: conv2(h) + h]
# ---------------------------------------------------------------------------
def _fused_kernel(x_ref, gin_ref, bin_ref, wpre_ref, bpre_ref,
                  gout_ref, bout_ref, wpost_ref, bpost_ref, o_ref,
                  *, L, mm_dtype):
    # x_ref    : (N*L, Cin)        channels-last input slab
    # wpre_ref : (2*Cin, 2*Cout)   packed ConvTranspose1d taps [[W1, W2], [0, W0]]
    # wpost_ref: (6*Cout, 2*Cout)  packed residual-conv taps (see wrapper)
    # o_ref    : (N*L, 2*Cout)     even|odd packed output
    x = x_ref[...].astype(jnp.float32)
    nl = x.shape[0]

    # ---- BN_in (training-mode batch stats over N*L) + ReLU -----------------------
    mean = jnp.mean(x, axis=0, keepdims=True)
    var = jnp.mean((x - mean) ** 2, axis=0, keepdims=True)
    h = (x - mean) * jax.lax.rsqrt(var + EPS) * gin_ref[...] + bin_ref[...]
    h = jnp.maximum(h, 0.0)

    # Per-batch-element boundary masks on the flattened row axis.
    rows = jax.lax.broadcasted_iota(jnp.int32, (nl, 1), 0)
    is_first = (rows % L) == 0
    is_last = (rows % L) == (L - 1)

    # ---- ConvTranspose1d as ONE packed matmul ------------------------------------
    #   y_even[j] = h[j] @ W[:,:,1] + b
    #   y_odd [j] = h[j] @ W[:,:,2] + h[j+1] @ W[:,:,0] + b        (h[L] := 0)
    h_next = jnp.where(is_last, 0.0, pltpu.roll(h, shift=nl - 1, axis=0))
    lhs_pre = jnp.concatenate([h, h_next], axis=1).astype(mm_dtype)        # (NL, 2*Cin)
    y = jnp.dot(lhs_pre, wpre_ref[...],
                preferred_element_type=jnp.float32) + bpre_ref[...]        # (NL, 2*Cout)

    # ---- BN_out: per-channel stats over BOTH packed halves (global batch stats) --
    cpack = y.shape[1]
    c = cpack // 2
    inv_cnt = 1.0 / (2.0 * nl)
    sum_y = jnp.sum(y, axis=0, keepdims=True)                              # (1, 2*Cout)
    m_half = (sum_y[:, :c] + sum_y[:, c:]) * inv_cnt                       # (1, Cout)
    mean2 = jnp.concatenate([m_half, m_half], axis=1)                      # (1, 2*Cout)
    cen = y - mean2
    ss = jnp.sum(cen * cen, axis=0, keepdims=True)
    v_half = (ss[:, :c] + ss[:, c:]) * inv_cnt
    var2 = jnp.concatenate([v_half, v_half], axis=1)
    h2 = cen * jax.lax.rsqrt(var2 + EPS) * gout_ref[...] + bout_ref[...]
    h2 = jnp.maximum(h2, 0.0)

    # ---- ResidualBlock as written in PyTorch: out = conv2(h2) + h2 ---------------
    # Conv1d(k=3, pad=1) on the interleaved length-2L sequence, in packed layout:
    #   even[j] = h_odd[j-1] @ Wc0 + h_even[j] @ Wc1 + h_odd[j]    @ Wc2
    #   odd [j] = h_even[j]  @ Wc0 + h_odd[j]  @ Wc1 + h_even[j+1] @ Wc2
    # expressed as one matmul of [h2p(j-1) | h2p(j) | h2p(j+1)] against wpost.
    h2_prev = jnp.where(is_first, 0.0, pltpu.roll(h2, shift=1, axis=0))
    h2_next = jnp.where(is_last, 0.0, pltpu.roll(h2, shift=nl - 1, axis=0))
    lhs_post = jnp.concatenate([h2_prev, h2, h2_next], axis=1).astype(mm_dtype)  # (NL, 6*Cout)
    out = (jnp.dot(lhs_post, wpost_ref[...], preferred_element_type=jnp.float32)
           + bpost_ref[...] + h2)                                          # residual add
    o_ref[...] = out


# ---------------------------------------------------------------------------
# Wrapper: layout glue + weight packing, one pallas_call.
# ---------------------------------------------------------------------------
def trancnn_block_forward(x_ncl, params, matmul_dtype=jnp.float32):
    N, Cin, L = x_ncl.shape
    Cout = params["tconv_w"].shape[1]

    # Channels-last slab: rows = flattened (batch, position), cols = channels.
    x2 = jnp.transpose(x_ncl, (0, 2, 1)).reshape(N * L, Cin).astype(jnp.float32)
    g_in = params["bn_in_g"].reshape(1, Cin)
    b_in = params["bn_in_b"].reshape(1, Cin)

    # Pack ConvTranspose1d taps into one (2*Cin, 2*Cout) operand: [[W1, W2], [0, W0]].
    w0 = params["tconv_w"][:, :, 0]
    w1 = params["tconv_w"][:, :, 1]
    w2 = params["tconv_w"][:, :, 2]
    w_pre = jnp.concatenate(
        [jnp.concatenate([w1, w2], axis=1),
         jnp.concatenate([jnp.zeros_like(w0), w0], axis=1)], axis=0).astype(matmul_dtype)
    b_pre = jnp.tile(params["tconv_b"].reshape(1, Cout), (1, 2)).astype(jnp.float32)

    # Pack residual conv2 taps into one (6*Cout, 2*Cout) operand.
    # Row blocks multiply [h_even(j-1) | h_odd(j-1) | h_even(j) | h_odd(j) | h_even(j+1) | h_odd(j+1)].
    wc = jnp.transpose(params["conv2_w"], (2, 1, 0))        # (3, Cin=Cout, Cout), (in, out) per tap
    z = jnp.zeros((Cout, Cout), jnp.float32)
    col_e = jnp.concatenate([z, wc[0], wc[1], wc[2], z, z], axis=0)   # even-position outputs
    col_o = jnp.concatenate([z, z, wc[0], wc[1], wc[2], z], axis=0)   # odd-position outputs
    w_post = jnp.concatenate([col_e, col_o], axis=1).astype(matmul_dtype)
    b_post = jnp.tile(params["conv2_b"].reshape(1, Cout), (1, 2)).astype(jnp.float32)

    g_out = jnp.tile(params["bn_out_g"].reshape(1, Cout), (1, 2)).astype(jnp.float32)
    b_out = jnp.tile(params["bn_out_b"].reshape(1, Cout), (1, 2)).astype(jnp.float32)

    vmem = pl.BlockSpec(memory_space=pltpu.MemorySpace.VMEM)

    out_packed = pl.pallas_call(
        functools.partial(_fused_kernel, L=L, mm_dtype=matmul_dtype),
        out_shape=jax.ShapeDtypeStruct((N * L, 2 * Cout), jnp.float32),
        in_specs=[vmem] * 9,
        out_specs=vmem,
    )(x2, g_in, b_in, w_pre, b_pre, g_out, b_out, w_post, b_post)

    # even|odd packed -> interleaved (N, 2L, Cout) -> PyTorch NCL (N, Cout, 2L).
    out = out_packed.reshape(N, L, 2, Cout).reshape(N, 2 * L, Cout)
    return jnp.transpose(out, (0, 2, 1))


# ---------------------------------------------------------------------------
# Deterministic parameter init (shapes follow the nn.Module __init__).
# ResidualBlock.conv1 / ResidualBlock.bn are dead code in forward -> omitted.
# ---------------------------------------------------------------------------
def init_params(key, Cin, Cout, K=3):
    ks = jax.random.split(key, 8)
    s1 = 1.0 / np.sqrt(Cin * K)
    s2 = 1.0 / np.sqrt(Cout * K)
    return dict(
        bn_in_g=jax.random.uniform(ks[0], (Cin,), jnp.float32, 0.5, 1.5),
        bn_in_b=jax.random.uniform(ks[1], (Cin,), jnp.float32, -0.1, 0.1),
        tconv_w=jax.random.uniform(ks[2], (Cin, Cout, K), jnp.float32, -s1, s1),
        tconv_b=jax.random.uniform(ks[3], (Cout,), jnp.float32, -s1, s1),
        bn_out_g=jax.random.uniform(ks[4], (Cout,), jnp.float32, 0.5, 1.5),
        bn_out_b=jax.random.uniform(ks[5], (Cout,), jnp.float32, -0.1, 0.1),
        conv2_w=jax.random.uniform(ks[6], (Cout, Cout, K), jnp.float32, -s2, s2),
        conv2_b=jax.random.uniform(ks[7], (Cout,), jnp.float32, -s2, s2),
    )


# ---------------------------------------------------------------------------
# Pure-JAX reference (independent of the kernel decomposition) for validation.
# ---------------------------------------------------------------------------
def ref_forward(x, p):
    hi = jax.lax.Precision.HIGHEST

    def bn(z, g, b):
        m = z.mean(axis=(0, 2), keepdims=True)
        v = ((z - m) ** 2).mean(axis=(0, 2), keepdims=True)
        return (z - m) / jnp.sqrt(v + EPS) * g[None, :, None] + b[None, :, None]

    h = jax.nn.relu(bn(x, p["bn_in_g"], p["bn_in_b"]))
    # ConvTranspose1d(k=3, stride=2, padding=1, output_padding=1) as dilated conv.
    wt = jnp.flip(jnp.transpose(p["tconv_w"], (1, 0, 2)), axis=2)   # (Cout, Cin, K)
    y = jax.lax.conv_general_dilated(
        h, wt, window_strides=(1,), padding=[(1, 2)], lhs_dilation=(2,),
        dimension_numbers=("NCH", "OIH", "NCH"), precision=hi)
    y = y + p["tconv_b"][None, :, None]
    h2 = jax.nn.relu(bn(y, p["bn_out_g"], p["bn_out_b"]))
    c = jax.lax.conv_general_dilated(
        h2, p["conv2_w"], window_strides=(1,), padding=[(1, 1)],
        dimension_numbers=("NCH", "OIH", "NCH"), precision=hi)
    return c + p["conv2_b"][None, :, None] + h2                     # conv2(h2) + h2


if __name__ == "__main__":
    key = jax.random.PRNGKey(0)
    kx, kp = jax.random.split(key)
    N, Cin, L, Cout = 2, 4, 16, 8          # PyTorch NCL input (N, C_in, L)
    x = jax.random.normal(kx, (N, Cin, L), jnp.float32)
    params = init_params(kp, Cin, Cout)

    ref = ref_forward(x, params)

    # f32 matmul operands (default): tight match with the f32 reference.
    out = jax.jit(trancnn_block_forward)(x, params)
    out = jax.block_until_ready(out)
    assert out.shape == (N, Cout, 2 * L), out.shape
    np.testing.assert_allclose(np.asarray(out), np.asarray(ref), rtol=1e-2, atol=1e-2)

    # bf16 matmul operands / f32 accumulation (the v6e/v7x-recommended setting for real
    # channel counts): exercised to ensure it compiles and stays numerically sane.
    out_bf16 = jax.jit(
        functools.partial(trancnn_block_forward, matmul_dtype=jnp.bfloat16))(x, params)
    out_bf16 = jax.block_until_ready(out_bf16)
    assert out_bf16.shape == (N, Cout, 2 * L), out_bf16.shape
    np.testing.assert_allclose(np.asarray(out_bf16), np.asarray(ref), rtol=1e-1, atol=1e-1)

    print("KERNEL_OK")
</pallas_src>

<mosaic_0001>
module attributes {stable_mosaic.version = 11 : i64} {
  func.func @_fused_kernel(%arg0: memref<32x4xf32, #tpu.memory_space<vmem>>, %arg1: memref<1x4xf32, #tpu.memory_space<vmem>>, %arg2: memref<1x4xf32, #tpu.memory_space<vmem>>, %arg3: memref<8x16xf32, #tpu.memory_space<vmem>>, %arg4: memref<1x16xf32, #tpu.memory_space<vmem>>, %arg5: memref<1x16xf32, #tpu.memory_space<vmem>>, %arg6: memref<1x16xf32, #tpu.memory_space<vmem>>, %arg7: memref<48x16xf32, #tpu.memory_space<vmem>>, %arg8: memref<1x16xf32, #tpu.memory_space<vmem>>, %arg9: memref<32x16xf32, #tpu.memory_space<vmem>>) attributes {dimension_semantics = [], scalar_prefetch = 0 : i64, scratch_operands = 0 : i64, tpu.core_type = #tpu.core_type<tc>} {
    %c0 = arith.constant 0 : index
    %c0_0 = arith.constant 0 : index
    %0 = vector.load %arg0[%c0, %c0_0] : memref<32x4xf32, #tpu.memory_space<vmem>>, vector<32x4xf32>
    %cst = arith.constant dense<0.000000e+00> : vector<4xf32>
    %1 = vector.multi_reduction <add>, %0, %cst [0] : vector<32x4xf32> to vector<4xf32>
    %2 = vector.shape_cast %1 : vector<4xf32> to vector<1x4xf32>
    %cst_1 = arith.constant 3.200000e+01 : f32
    %3 = vector.broadcast %cst_1 : f32 to vector<1x4xf32>
    %4 = arith.divf %2, %3 : vector<1x4xf32>
    %5 = vector.broadcast %4 : vector<1x4xf32> to vector<32x4xf32>
    %6 = arith.subf %0, %5 : vector<32x4xf32>
    %7 = arith.mulf %6, %6 : vector<32x4xf32>
    %cst_2 = arith.constant dense<0.000000e+00> : vector<4xf32>
    %8 = vector.multi_reduction <add>, %7, %cst_2 [0] : vector<32x4xf32> to vector<4xf32>
    %9 = vector.shape_cast %8 : vector<4xf32> to vector<1x4xf32>
    %cst_3 = arith.constant 3.200000e+01 : f32
    %10 = vector.broadcast %cst_3 : f32 to vector<1x4xf32>
    %11 = arith.divf %9, %10 : vector<1x4xf32>
    %12 = vector.broadcast %4 : vector<1x4xf32> to vector<32x4xf32>
    %13 = arith.subf %0, %12 : vector<32x4xf32>
    %cst_4 = arith.constant 9.99999974E-6 : f32
    %14 = vector.broadcast %cst_4 : f32 to vector<1x4xf32>
    %15 = arith.addf %11, %14 : vector<1x4xf32>
    %16 = math.rsqrt %15 : vector<1x4xf32>
    %17 = vector.broadcast %16 : vector<1x4xf32> to vector<32x4xf32>
    %18 = arith.mulf %13, %17 : vector<32x4xf32>
    %c0_5 = arith.constant 0 : index
    %c0_6 = arith.constant 0 : index
    %19 = vector.load %arg1[%c0_5, %c0_6] : memref<1x4xf32, #tpu.memory_space<vmem>>, vector<1x4xf32>
    %20 = vector.broadcast %19 : vector<1x4xf32> to vector<32x4xf32>
    %21 = arith.mulf %18, %20 : vector<32x4xf32>
    %c0_7 = arith.constant 0 : index
    %c0_8 = arith.constant 0 : index
    %22 = vector.load %arg2[%c0_7, %c0_8] : memref<1x4xf32, #tpu.memory_space<vmem>>, vector<1x4xf32>
    %23 = vector.broadcast %22 : vector<1x4xf32> to vector<32x4xf32>
    %24 = arith.addf %21, %23 : vector<32x4xf32>
    %cst_9 = arith.constant 0.000000e+00 : f32
    %25 = vector.broadcast %cst_9 : f32 to vector<32x4xf32>
    %26 = arith.maximumf %24, %25 : vector<32x4xf32>
    %27 = tpu.iota {dimensions = array<i32: 0>} : vector<32x1xi32>
    %c16_i32 = arith.constant 16 : i32
    %c0_i32 = arith.constant 0 : i32
    %28 = arith.cmpi eq, %c16_i32, %c0_i32 : i32
    %c1_i32 = arith.constant 1 : i32
    %29 = arith.select %28, %c1_i32, %c16_i32 : i32
    %30 = vector.broadcast %29 : i32 to vector<32x1xi32>
    %31 = arith.remsi %27, %30 : vector<32x1xi32>
    %c0_i32_10 = arith.constant 0 : i32
    %32 = vector.broadcast %c0_i32_10 : i32 to vector<32x1xi32>
    %33 = arith.cmpi ne, %31, %32 : vector<32x1xi32>
    %c0_i32_11 = arith.constant 0 : i32
    %34 = vector.broadcast %c0_i32_11 : i32 to vector<32x1xi32>
    %35 = arith.cmpi slt, %31, %34 : vector<32x1xi32>
    %c0_i32_12 = arith.constant 0 : i32
    %36 = arith.cmpi slt, %29, %c0_i32_12 : i32
    %37 = vector.broadcast %36 : i1 to vector<32x1xi1>
    %38 = vector.broadcast %37 : vector<32x1xi1> to vector<32x1xi1>
    %39 = arith.xori %35, %38 : vector<32x1xi1>
    %40 = arith.andi %39, %33 : vector<32x1xi1>
    %41 = vector.broadcast %29 : i32 to vector<32x1xi32>
    %42 = arith.addi %31, %41 : vector<32x1xi32>
    %43 = arith.select %40, %42, %31 : vector<32x1xi1>, vector<32x1xi32>
    %c0_i32_13 = arith.constant 0 : i32
    %44 = vector.broadcast %c0_i32_13 : i32 to vector<32x1xi32>
    %45 = arith.cmpi eq, %43, %44 : vector<32x1xi32>
    %c16_i32_14 = arith.constant 16 : i32
    %c0_i32_15 = arith.constant 0 : i32
    %46 = arith.cmpi eq, %c16_i32_14, %c0_i32_15 : i32
    %c1_i32_16 = arith.constant 1 : i32
    %47 = arith.select %46, %c1_i32_16, %c16_i32_14 : i32
    %48 = vector.broadcast %47 : i32 to vector<32x1xi32>
    %49 = arith.remsi %27, %48 : vector<32x1xi32>
    %c0_i32_17 = arith.constant 0 : i32
    %50 = vector.broadcast %c0_i32_17 : i32 to vector<32x1xi32>
    %51 = arith.cmpi ne, %49, %50 : vector<32x1xi32>
    %c0_i32_18 = arith.constant 0 : i32
    %52 = vector.broadcast %c0_i32_18 : i32 to vector<32x1xi32>
    %53 = arith.cmpi slt, %49, %52 : vector<32x1xi32>
    %c0_i32_19 = arith.constant 0 : i32
    %54 = arith.cmpi slt, %47, %c0_i32_19 : i32
    %55 = vector.broadcast %54 : i1 to vector<32x1xi1>
    %56 = vector.broadcast %55 : vector<32x1xi1> to vector<32x1xi1>
    %57 = arith.xori %53, %56 : vector<32x1xi1>
    %58 = arith.andi %57, %51 : vector<32x1xi1>
    %59 = vector.broadcast %47 : i32 to vector<32x1xi32>
    %60 = arith.addi %49, %59 : vector<32x1xi32>
    %61 = arith.select %58, %60, %49 : vector<32x1xi1>, vector<32x1xi32>
    %c15_i32 = arith.constant 15 : i32
    %62 = vector.broadcast %c15_i32 : i32 to vector<32x1xi32>
    %63 = arith.cmpi eq, %61, %62 : vector<32x1xi32>
    %c31_i32 = arith.constant 31 : i32
    %64 = tpu.dynamic_rotate %26 by %c31_i32 dim 0 : vector<32x4xf32>, i32 -> vector<32x4xf32>
    %cst_20 = arith.constant 0.000000e+00 : f32
    %65 = vector.shape_cast %63 : vector<32x1xi1> to vector<32x1xi1>
    %66 = vector.broadcast %65 : vector<32x1xi1> to vector<32x4xi1>
    %67 = vector.broadcast %cst_20 : f32 to vector<32x4xf32>
    %68 = arith.select %66, %67, %64 : vector<32x4xi1>, vector<32x4xf32>
    %69 = tpu.concatenate %26, %68 in 1 : vector<32x4xf32>, vector<32x4xf32> -> vector<32x8xf32>
    %c0_21 = arith.constant 0 : index
    %c0_22 = arith.constant 0 : index
    %70 = vector.load %arg3[%c0_21, %c0_22] : memref<8x16xf32, #tpu.memory_space<vmem>>, vector<8x16xf32>
    %cst_23 = arith.constant dense<0.000000e+00> : vector<32x16xf32>
    %71 = tpu.matmul %69, %70, %cst_23 {dimension_numbers = #tpu.dot_dimension_numbers<[1], [0], [0], [1], [0, 0, 1, 1], [], []>} : vector<32x8xf32>, vector<8x16xf32>, vector<32x16xf32> -> vector<32x16xf32>
    %c0_24 = arith.constant 0 : index
    %c0_25 = arith.constant 0 : index
    %72 = vector.load %arg4[%c0_24, %c0_25] : memref<1x16xf32, #tpu.memory_space<vmem>>, vector<1x16xf32>
    %73 = vector.broadcast %72 : vector<1x16xf32> to vector<32x16xf32>
    %74 = arith.addf %71, %73 : vector<32x16xf32>
    %cst_26 = arith.constant dense<0.000000e+00> : vector<16xf32>
    %75 = vector.multi_reduction <add>, %74, %cst_26 [0] : vector<32x16xf32> to vector<16xf32>
    %76 = vector.shape_cast %75 : vector<16xf32> to vector<1x16xf32>
    %77 = vector.extract_strided_slice %76 {offsets = [0, 0], sizes = [1, 8], strides = [1, 1]} : vector<1x16xf32> to vector<1x8xf32>
    %78 = vector.extract_strided_slice %76 {offsets = [0, 8], sizes = [1, 8], strides = [1, 1]} : vector<1x16xf32> to vector<1x8xf32>
    %79 = arith.addf %77, %78 : vector<1x8xf32>
    %cst_27 = arith.constant 1.562500e-02 : f32
    %80 = vector.broadcast %cst_27 : f32 to vector<1x8xf32>
    %81 = arith.mulf %79, %80 : vector<1x8xf32>
    %82 = tpu.concatenate %81, %81 in 1 : vector<1x8xf32>, vector<1x8xf32> -> vector<1x16xf32>
    %83 = vector.broadcast %82 : vector<1x16xf32> to vector<32x16xf32>
    %84 = arith.subf %74, %83 : vector<32x16xf32>
    %85 = arith.mulf %84, %84 : vector<32x16xf32>
    %cst_28 = arith.constant dense<0.000000e+00> : vector<16xf32>
    %86 = vector.multi_reduction <add>, %85, %cst_28 [0] : vector<32x16xf32> to vector<16xf32>
    %87 = vector.shape_cast %86 : vector<16xf32> to vector<1x16xf32>
    %88 = vector.extract_strided_slice %87 {offsets = [0, 0], sizes = [1, 8], strides = [1, 1]} : vector<1x16xf32> to vector<1x8xf32>
    %89 = vector.extract_strided_slice %87 {offsets = [0, 8], sizes = [1, 8], strides = [1, 1]} : vector<1x16xf32> to vector<1x8xf32>
    %90 = arith.addf %88, %89 : vector<1x8xf32>
    %cst_29 = arith.constant 1.562500e-02 : f32
    %91 = vector.broadcast %cst_29 : f32 to vector<1x8xf32>
    %92 = arith.mulf %90, %91 : vector<1x8xf32>
    %93 = tpu.concatenate %92, %92 in 1 : vector<1x8xf32>, vector<1x8xf32> -> vector<1x16xf32>
    %cst_30 = arith.constant 9.99999974E-6 : f32
    %94 = vector.broadcast %cst_30 : f32 to vector<1x16xf32>
    %95 = arith.addf %93, %94 : vector<1x16xf32>
    %96 = math.rsqrt %95 : vector<1x16xf32>
    %97 = vector.broadcast %96 : vector<1x16xf32> to vector<32x16xf32>
    %98 = arith.mulf %84, %97 : vector<32x16xf32>
    %c0_31 = arith.constant 0 : index
    %c0_32 = arith.constant 0 : index
    %99 = vector.load %arg5[%c0_31, %c0_32] : memref<1x16xf32, #tpu.memory_space<vmem>>, vector<1x16xf32>
    %100 = vector.broadcast %99 : vector<1x16xf32> to vector<32x16xf32>
    %101 = arith.mulf %98, %100 : vector<32x16xf32>
    %c0_33 = arith.constant 0 : index
    %c0_34 = arith.constant 0 : index
    %102 = vector.load %arg6[%c0_33, %c0_34] : memref<1x16xf32, #tpu.memory_space<vmem>>, vector<1x16xf32>
    %103 = vector.broadcast %102 : vector<1x16xf32> to vector<32x16xf32>
    %104 = arith.addf %101, %103 : vector<32x16xf32>
    %cst_35 = arith.constant 0.000000e+00 : f32
    %105 = vector.broadcast %cst_35 : f32 to vector<32x16xf32>
    %106 = arith.maximumf %104, %105 : vector<32x16xf32>
    %c1_i32_36 = arith.constant 1 : i32
    %107 = tpu.dynamic_rotate %106 by %c1_i32_36 dim 0 : vector<32x16xf32>, i32 -> vector<32x16xf32>
    %cst_37 = arith.constant 0.000000e+00 : f32
    %108 = vector.shape_cast %45 : vector<32x1xi1> to vector<32x1xi1>
    %109 = vector.broadcast %108 : vector<32x1xi1> to vector<32x16xi1>
    %110 = vector.broadcast %cst_37 : f32 to vector<32x16xf32>
    %111 = arith.select %109, %110, %107 : vector<32x16xi1>, vector<32x16xf32>
    %c31_i32_38 = arith.constant 31 : i32
    %112 = tpu.dynamic_rotate %106 by %c31_i32_38 dim 0 : vector<32x16xf32>, i32 -> vector<32x16xf32>
    %cst_39 = arith.constant 0.000000e+00 : f32
    %113 = vector.shape_cast %63 : vector<32x1xi1> to vector<32x1xi1>
    %114 = vector.broadcast %113 : vector<32x1xi1> to vector<32x16xi1>
    %115 = vector.broadcast %cst_39 : f32 to vector<32x16xf32>
    %116 = arith.select %114, %115, %112 : vector<32x16xi1>, vector<32x16xf32>
    %117 = tpu.concatenate %111, %106, %116 in 1 : vector<32x16xf32>, vector<32x16xf32>, vector<32x16xf32> -> vector<32x48xf32>
    %c0_40 = arith.constant 0 : index
    %c0_41 = arith.constant 0 : index
    %118 = vector.load %arg7[%c0_40, %c0_41] : memref<48x16xf32, #tpu.memory_space<vmem>>, vector<48x16xf32>
    %cst_42 = arith.constant dense<0.000000e+00> : vector<32x16xf32>
    %119 = tpu.matmul %117, %118, %cst_42 {dimension_numbers = #tpu.dot_dimension_numbers<[1], [0], [0], [1], [0, 0, 1, 1], [], []>} : vector<32x48xf32>, vector<48x16xf32>, vector<32x16xf32> -> vector<32x16xf32>
    %c0_43 = arith.constant 0 : index
    %c0_44 = arith.constant 0 : index
    %120 = vector.load %arg8[%c0_43, %c0_44] : memref<1x16xf32, #tpu.memory_space<vmem>>, vector<1x16xf32>
    %121 = vector.broadcast %120 : vector<1x16xf32> to vector<32x16xf32>
    %122 = arith.addf %119, %121 : vector<32x16xf32>
    %123 = arith.addf %122, %106 : vector<32x16xf32>
    %c0_45 = arith.constant 0 : index
    %c0_46 = arith.constant 0 : index
    %124 = vector.load %arg9[%c0_45, %c0_46] : memref<32x16xf32, #tpu.memory_space<vmem>>, vector<32x16xf32>
    tpu.vector_store %arg9[%c0_45, %c0_46], %123 {strides = array<i32>} : memref<32x16xf32, #tpu.memory_space<vmem>>, vector<32x16xf32>,
    return
  }
}

</mosaic_0001>

<llo_original>
// kernel: trancnn_block_forward.1
$region0: #{trancnn_block_forward.1}
  #allocation0 [shape = 'u32[]', space=smem, size = 0x4, offset = 0x4, fixed_abs, tag = 'smem constant byte address 0x4 - core index']
  #allocation1 [shape = 'u32[144,128]{1,0:T(1,128)}', space=vmem, size = 0x12000, scoped, tag = 'internal scratch']
  %s0 = inlined_call_operand.vmem [shape: f32[32,4], index: 0, kind: input, shape index: {}]
  %s1 = inlined_call_operand.vmem [shape: f32[1,4], index: 1, kind: input, shape index: {}]
  %s2 = inlined_call_operand.vmem [shape: f32[1,4], index: 2, kind: input, shape index: {}]
  %s3 = inlined_call_operand.vmem [shape: f32[8,16], index: 3, kind: input, shape index: {}]
  %s4 = inlined_call_operand.vmem [shape: f32[1,16], index: 4, kind: input, shape index: {}]
  %s5 = inlined_call_operand.vmem [shape: f32[1,16], index: 5, kind: input, shape index: {}]
  %s6 = inlined_call_operand.vmem [shape: f32[1,16], index: 6, kind: input, shape index: {}]
  %s7 = inlined_call_operand.vmem [shape: f32[48,16], index: 7, kind: input, shape index: {}]
  %s8 = inlined_call_operand.vmem [shape: f32[1,16], index: 8, kind: input, shape index: {}]
  %s9 = inlined_call_operand.vmem [shape: f32[32,16], index: 9, kind: output, shape index: {}]
  %s10 = sld [smem:[#allocation0]]
  $region46: #{trancnn_block_forward.1} parent=0
    _
  %s12 = ssub.s32 1, %s10
  %s13 = scalar_select 0, %s12, %s10
  // Predicated region
  $region2: #{trancnn_block_forward.1} parent=0 // pred_check
    _
  $region3: #{trancnn_block_forward.1} parent=0 // pred_check_branch
    %15 = sbr.rel (0) target = $region5
  $region4: #{trancnn_block_forward.1} parent=0 // pred_region
    _
  $region5: #{trancnn_block_forward.1} parent=0 // pred_fallthru
    _
  // Predicated region
  $region6: #{trancnn_block_forward.1} parent=0 // pred_check
    _
  $region7: #{trancnn_block_forward.1} parent=0 // pred_check_branch
    %17 = sbr.rel (0) target = $region9
  $region8: #{trancnn_block_forward.1} parent=0 // pred_region
    _
  $region9: #{trancnn_block_forward.1} parent=0 // pred_fallthru
    _
  // Predicated region
  $region10: #{trancnn_block_forward.1} parent=0 // pred_check
    _
  $region11: #{trancnn_block_forward.1} parent=0 // pred_check_branch
    %19 = sbr.rel (0) target = $region13
  $region12: #{trancnn_block_forward.1} parent=0 // pred_region
    _
  $region13: #{trancnn_block_forward.1} parent=0 // pred_fallthru
    _
  // Predicated region
  $region14: #{trancnn_block_forward.1} parent=0 // pred_check
    _
  $region15: #{trancnn_block_forward.1} parent=0 // pred_check_branch
    %21 = sbr.rel (0) target = $region17
  $region16: #{trancnn_block_forward.1} parent=0 // pred_region
    _
  $region17: #{trancnn_block_forward.1} parent=0 // pred_fallthru
    _
  // Predicated region
  $region18: #{trancnn_block_forward.1} parent=0 // pred_check
    _
  $region19: #{trancnn_block_forward.1} parent=0 // pred_check_branch
    %23 = sbr.rel (0) target = $region21
  $region20: #{trancnn_block_forward.1} parent=0 // pred_region
    _
  $region21: #{trancnn_block_forward.1} parent=0 // pred_fallthru
    _
  // Predicated region
  $region22: #{trancnn_block_forward.1} parent=0 // pred_check
    _
  $region23: #{trancnn_block_forward.1} parent=0 // pred_check_branch
    %25 = sbr.rel (0) target = $region25
  $region24: #{trancnn_block_forward.1} parent=0 // pred_region
    _
  $region25: #{trancnn_block_forward.1} parent=0 // pred_fallthru
    _
  // Predicated region
  $region26: #{trancnn_block_forward.1} parent=0 // pred_check
    _
  $region27: #{trancnn_block_forward.1} parent=0 // pred_check_branch
    %27 = sbr.rel (0) target = $region29
  $region28: #{trancnn_block_forward.1} parent=0 // pred_region
    _
  $region29: #{trancnn_block_forward.1} parent=0 // pred_fallthru
    _
  // Predicated region
  $region30: #{trancnn_block_forward.1} parent=0 // pred_check
    _
  $region31: #{trancnn_block_forward.1} parent=0 // pred_check_branch
    %29 = sbr.rel (0) target = $region33
  $region32: #{trancnn_block_forward.1} parent=0 // pred_region
    _
  $region33: #{trancnn_block_forward.1} parent=0 // pred_fallthru
    _
  // Predicated region
  $region34: #{trancnn_block_forward.1} parent=0 // pred_check
    _
  $region35: #{trancnn_block_forward.1} parent=0 // pred_check_branch
    %31 = sbr.rel (0) target = $region37
  $region36: #{trancnn_block_forward.1} parent=0 // pred_region
    _
  $region37: #{trancnn_block_forward.1} parent=0 // pred_fallthru
    _
  %v32 = vld [vmem:[%s0] sm:$0xff]
  %v33 = vld [vmem:[%s0 + $0x8] sm:$0xff]
  %v34 = vld [vmem:[%s0 + $0x10] sm:$0xff]
  %v35 = vld [vmem:[%s0 + $0x18] sm:$0xff]
  %vm36 = vcmask 31744
  %v37 = vsel %vm36, %v32, 0.0
  %v38 = vsel %vm36, %v33, 0.0
  %v39 = vadd.f32 %v37, %v38
  %v40 = vsel %vm36, %v34, 0.0
  %v41 = vadd.f32 %v39, %v40
  %v42 = vsel %vm36, %v35, 0.0
  %v43 = vadd.f32 %v41, %v42
  %v44 = vrot.slane %v43, 4
  %v45 = vadd.f32 %v43, %v44
  %v46 = vrot.slane %v45, 2
  %v47 = vadd.f32 %v45, %v46
  %v48 = vrot.slane %v47, 1
  %v49 = vadd.f32 %v47, %v48
  %v50 = vrcp.pop 32.0
  %v51 = vmul.f32 %v49, %v50
  %v52 = vsub.f32 %v32, %v51
  %v53 = vsub.f32 %v33, %v51
  %v54 = vsub.f32 %v34, %v51
  %v55 = vsub.f32 %v35, %v51
  %v56 = vmul.f32 %v52, %v52
  %v57 = vmul.f32 %v53, %v53
  %v58 = vmul.f32 %v54, %v54
  %v59 = vmul.f32 %v55, %v55
  %v60 = vsel %vm36, %v56, 0.0
  %v61 = vsel %vm36, %v57, 0.0
  %v62 = vadd.f32 %v60, %v61
  %v63 = vsel %vm36, %v58, 0.0
  %v64 = vadd.f32 %v62, %v63
  %v65 = vsel %vm36, %v59, 0.0
  %v66 = vadd.f32 %v64, %v65
  %v67 = vrot.slane %v66, 4
  %v68 = vadd.f32 %v66, %v67
  %v69 = vrot.slane %v68, 2
  %v70 = vadd.f32 %v68, %v69
  %v71 = vrot.slane %v70, 1
  %v72 = vadd.f32 %v70, %v71
  %v73 = vmul.f32 %v72, %v50
  %v74 = vadd.f32 %v73, 1e-05
  %v75 = vrsqrt.pop %v74
  %v76 = vmul.f32 %v52, %v75
  %v77 = vmul.f32 %v53, %v75
  %v78 = vmul.f32 %v54, %v75
  %v79 = vmul.f32 %v55, %v75
  %v80 = vld [vmem:[%s1] sm:$0x1]
  %v82 = vlaneseq
  %v83 = vshrl.u32 %v82, 7
  %v84 = vsub.s32 0, %v83
  %v85 = vrot.slane %v80, %v84
  %v87 = vmul.f32 %v76, %v85
  %v88 = vmul.f32 %v77, %v85
  %v89 = vmul.f32 %v78, %v85
  %v90 = vmul.f32 %v79, %v85
  %v91 = vld [vmem:[%s2] sm:$0x1]
  %v93 = vlaneseq
  %v94 = vshrl.u32 %v93, 7
  %v95 = vsub.s32 0, %v94
  %v96 = vrot.slane %v91, %v95
  %v98 = vadd.f32 %v87, %v96
  %v99 = vadd.f32 %v88, %v96
  %v100 = vadd.f32 %v89, %v96
  %v101 = vadd.f32 %v90, %v96
  %v102 = vmax.f32 %v98, 0.0
  %v103 = vmax.f32 %v99, 0.0
  %v104 = vmax.f32 %v100, 0.0
  %v105 = vmax.f32 %v101, 0.0
  %v106 = vlaneseq
  %v107 = vshrl.u32 %v106, 7
  %v108 = vadd.s32 %v107, 8
  %v109 = vadd.s32 %v107, 16
  %v110 = vadd.s32 %v107, 24
  %vm111 = vcmp.lt.s32.totalorder %v107, 0
  %v112 = vsub.s32 0, %v107
  %v113 = vsel %vm111, %v112, %v107
  %v114 = vshrl.u32 %v113, 4
  %v115 = vand.u32 %v113, 15
  %v116 = vsub.s32 0, %v115
  %v117 = vsel %vm111, %v116, %v115
  %vm118 = vcmp.lt.s32.totalorder %v108, 0
  %v119 = vsub.s32 0, %v108
  %v120 = vsel %vm118, %v119, %v108
  %v121 = vshrl.u32 %v120, 4
  %v122 = vand.u32 %v120, 15
  %v123 = vsub.s32 0, %v122
  %v124 = vsel %vm118, %v123, %v122
  %vm125 = vcmp.lt.s32.totalorder %v109, 0
  %v126 = vsub.s32 0, %v109
  %v127 = vsel %vm125, %v126, %v109
  %v128 = vshrl.u32 %v127, 4
  %v129 = vand.u32 %v127, 15
  %v130 = vsub.s32 0, %v129
  %v131 = vsel %vm125, %v130, %v129
  %vm132 = vcmp.lt.s32.totalorder %v110, 0
  %v133 = vsub.s32 0, %v110
  %v134 = vsel %vm132, %v133, %v110
  %v135 = vshrl.u32 %v134, 4
  %v136 = vand.u32 %v134, 15
  %v137 = vsub.s32 0, %v136
  %v138 = vsel %vm132, %v137, %v136
  %vm139 = vcmp.ne.s32.totalorder %v117, 0
  %vm140 = vcmp.ne.s32.totalorder %v124, 0
  %vm141 = vcmp.ne.s32.totalorder %v131, 0
  %vm142 = vcmp.ne.s32.totalorder %v138, 0
  %vm143 = vcmp.lt.s32.totalorder %v117, 0
  %vm144 = vcmp.lt.s32.totalorder %v124, 0
  %vm145 = vcmp.lt.s32.totalorder %v131, 0
  %vm146 = vcmp.lt.s32.totalorder %v138, 0
  %vm147 = vmand %vm143, %vm139
  %vm148 = vmand %vm144, %vm140
  %vm149 = vmand %vm145, %vm141
  %vm150 = vmand %vm146, %vm142
  %v151 = vadd.s32 %v117, 16
  %v152 = vadd.s32 %v124, 16
  %v153 = vadd.s32 %v131, 16
  %v154 = vadd.s32 %v138, 16
  %v155 = vsel %vm147, %v151, %v117
  %v156 = vsel %vm148, %v152, %v124
  %v157 = vsel %vm149, %v153, %v131
  %v158 = vsel %vm150, %v154, %v138
  %vm159 = vcmp.eq.s32.totalorder %v155, 0
  %vm160 = vcmp.eq.s32.totalorder %v156, 0
  %vm161 = vcmp.eq.s32.totalorder %v157, 0
  %vm162 = vcmp.eq.s32.totalorder %v158, 0
  %vm163 = vcmp.eq.s32.totalorder %v155, 15
  %vm164 = vcmp.eq.s32.totalorder %v156, 15
  %vm165 = vcmp.eq.s32.totalorder %v157, 15
  %vm166 = vcmp.eq.s32.totalorder %v158, 15
  %v167 = vrot.slane %v102, 1
  %v168 = vrot.slane %v103, 1
  %v169 = vrot.slane %v104, 1
  %v170 = vrot.slane %v105, 1
  %vm171 = vcmp.lt.s32.totalorder %v107, 7
  %v172 = vsel %vm171, %v169, %v170
  %v173 = vsel %vm171, %v168, %v169
  %v174 = vsel %vm171, %v167, %v168
  %v175 = vsel %vm171, %v170, %v167
  %v176 = vsel %vm163, 1, 0
  %v177 = vsel %vm164, 1, 0
  %v178 = vsel %vm165, 1, 0
  %v179 = vsel %vm166, 1, 0
  %vm180 = vcmp.eq.s32.totalorder %v176, 1
  %vm181 = vcmp.eq.s32.totalorder %v177, 1
  %vm182 = vcmp.eq.s32.totalorder %v178, 1
  %vm183 = vcmp.eq.s32.totalorder %v179, 1
  %v184 = vsel %vm180, 0.0, %v174
  %v185 = vsel %vm181, 0.0, %v173
  %v186 = vsel %vm182, 0.0, %v172
  %v187 = vsel %vm183, 0.0, %v175
  %192 = vrot.lane.b32.xlu0 %v184, 4
  %v193 = vpop.permute.xlu0 %192
  %194 = vrot.lane.b32.xlu0 %v185, 4
  %v195 = vpop.permute.xlu0 %194
  %196 = vrot.lane.b32.xlu0 %v186, 4
  %v197 = vpop.permute.xlu0 %196
  %198 = vrot.lane.b32.xlu0 %v187, 4
  %v199 = vpop.permute.xlu0 %198
  %v204 = vsel %vm36, %v102, %v193
  %v205 = vsel %vm36, %v103, %v195
  %v206 = vsel %vm36, %v104, %v197
  %v207 = vsel %vm36, %v105, %v199
  %v208 = vld [vmem:[%s3] sm:$0xff]
  %v209 = vld [vmem:[%s4] sm:$0x1]
  %v211 = vlaneseq
  %v212 = vshrl.u32 %v211, 7
  %v213 = vsub.s32 0, %v212
  %v214 = vrot.slane %v209, %v213
  %vm216 = vcmask 64512
  %v218 = vsel %vm216, %v204, 0
  %v221 = vsel %vm216, %v205, 0
  %v224 = vsel %vm216, %v206, 0
  %v227 = vsel %vm216, %v207, 0
  %229 = vmatprep.subr.mxu0 0.0
  %230 = vmatpush1.msra.mxu0 %v208
  %231 = vmatprep.subr.mxu0 0.0
  %232 = vmatpush1.msra.mxu0 0.0
  %233 = vmatprep.subr.mxu0 0.0
  %234 = vmatpush1.msra.mxu0 0.0
  %235 = vmatprep.subr.mxu0 0.0
  %236 = vmatpush1.msra.mxu0 0.0
  %237 = vmatprep.subr.mxu0 0.0
  %238 = vmatpush1.msra.mxu0 0.0
  %239 = vmatprep.subr.mxu0 0.0
  %240 = vmatpush1.msra.mxu0 0.0
  %241 = vmatprep.subr.mxu0 0.0
  %242 = vmatpush1.msra.mxu0 0.0
  %243 = vmatprep.subr.mxu0 0.0
  %244 = vmatpush1.msra.mxu0 0.0
  %245 = vmatprep.subr.mxu0 0.0
  %246 = vmatpush1.msra.mxu0 0.0
  %247 = vmatprep.subr.mxu0 0.0
  %248 = vmatpush1.msra.mxu0 0.0
  %249 = vmatprep.subr.mxu0 0.0
  %250 = vmatpush1.msra.mxu0 0.0
  %251 = vmatprep.subr.mxu0 0.0
  %252 = vmatpush1.msra.mxu0 0.0
  %253 = vmatprep.subr.mxu0 0.0
  %254 = vmatpush1.msra.mxu0 0.0
  %255 = vmatprep.subr.mxu0 0.0
  %256 = vmatpush1.msra.mxu0 0.0
  %257 = vmatprep.subr.mxu0 0.0
  %258 = vmatpush1.msra.mxu0 0.0
  %259 = vmatprep.subr.mxu0 0.0
  %260 = vmatpush1.msra.mxu0 0.0
  %261 = vmatprep.subr.mxu0 0.0
  %262 = vmatpush1.msra.mxu0 0.0
  %263 = vmatprep.subr.mxu0 0.0
  %264 = vmatpush1.msra.mxu0 0.0
  %265 = vmatprep.subr.mxu0 0.0
  %266 = vmatpush1.msra.mxu0 0.0
  %267 = vmatprep.subr.mxu0 0.0
  %268 = vmatpush1.msra.mxu0 0.0
  %269 = vmatprep.subr.mxu0 0.0
  %270 = vmatpush1.msra.mxu0 0.0
  %271 = vmatprep.subr.mxu0 0.0
  %272 = vmatpush1.msra.mxu0 0.0
  %273 = vmatprep.subr.mxu0 0.0
  %274 = vmatpush1.msra.mxu0 0.0
  %275 = vmatprep.subr.mxu0 0.0
  %276 = vmatpush1.msra.mxu0 0.0
  %277 = vmatprep.subr.mxu0 0.0
  %278 = vmatpush1.msra.mxu0 0.0
  %279 = vmatprep.subr.mxu0 0.0
  %280 = vmatpush1.msra.mxu0 0.0
  %281 = vmatprep.subr.mxu0 0.0
  %282 = vmatpush1.msra.mxu0 0.0
  %283 = vmatprep.subr.mxu0 0.0
  %284 = vmatpush1.msra.mxu0 0.0
  %285 = vmatprep.subr.mxu0 0.0
  %286 = vmatpush1.msra.mxu0 0.0
  %287 = vmatprep.subr.mxu0 0.0
  %288 = vmatpush1.msra.mxu0 0.0
  %289 = vmatprep.subr.mxu0 0.0
  %290 = vmatpush1.msra.mxu0 0.0
  %291 = vmatprep.subr.mxu0 0.0
  %292 = vmatpush1.msra.mxu0 0.0
  %293 = vmatprep.mubr.f32.mxu0 0.0
  %294 = vmatmul.mubr.f32.gmra.mrb[0].mxu0 %v218
  %v295 = vpop.f32.mrb[0].mxu0
  %v296 = vadd.f32 %v214, %v295
  %v297 = vpop.f32.mrb[0].mxu0
  %298 = vmatprep.mubr.f32.mxu0 0.0
  %299 = vmatmul.mubr.f32.gmra.mrb[0].mxu0 %v221
  %v300 = vpop.f32.mrb[0].mxu0
  %v301 = vadd.f32 %v214, %v300
  %v302 = vpop.f32.mrb[0].mxu0
  %303 = vmatprep.mubr.f32.mxu0 0.0
  %304 = vmatmul.mubr.f32.gmra.mrb[0].mxu0 %v224
  %v305 = vpop.f32.mrb[0].mxu0
  %v306 = vadd.f32 %v214, %v305
  %v307 = vpop.f32.mrb[0].mxu0
  %308 = vmatprep.mubr.f32.mxu0 0.0
  %309 = vmatmul.mubr.f32.gmra.mrb[0].mxu0 %v227
  %v310 = vpop.f32.mrb[0].mxu0
  %v311 = vadd.f32 %v214, %v310
  %v312 = vpop.f32.mrb[0].mxu0
  %313 = vdwg.mxu0
  %vm314 = vcmask 130048
  %v315 = vsel %vm314, %v296, 0.0
  %v316 = vsel %vm314, %v301, 0.0
  %v317 = vadd.f32 %v315, %v316
  %v318 = vsel %vm314, %v306, 0.0
  %v319 = vadd.f32 %v317, %v318
  %v320 = vsel %vm314, %v311, 0.0
  %v321 = vadd.f32 %v319, %v320
  %v322 = vrot.slane %v321, 4
  %v323 = vadd.f32 %v321, %v322
  %v324 = vrot.slane %v323, 2
  %v325 = vadd.f32 %v323, %v324
  %v326 = vrot.slane %v325, 1
  %v327 = vadd.f32 %v325, %v326
  %329 = vrot.lane.b32.xlu0 %v327, 120
  %v330 = vpop.permute.xlu0 %329
  %v332 = vadd.f32 %v327, %v330
  %v333 = vmul.f32 %v332, 0.015625
  %335 = vrot.lane.b32.xlu0 %v333, 8
  %v336 = vpop.permute.xlu0 %335
  %v338 = vsel %vm216, %v333, %v336
  %v339 = vlaneseq
  %v340 = vshrl.u32 %v339, 7
  %v341 = vsub.s32 0, %v340
  %v342 = vrot.slane %v338, %v341
  %v343 = vsub.f32 %v296, %v342
  %v344 = vsub.f32 %v301, %v342
  %v345 = vsub.f32 %v306, %v342
  %v346 = vsub.f32 %v311, %v342
  %v347 = vmul.f32 %v343, %v343
  %v348 = vmul.f32 %v344, %v344
  %v349 = vmul.f32 %v345, %v345
  %v350 = vmul.f32 %v346, %v346
  %v351 = vsel %vm314, %v347, 0.0
  %v352 = vsel %vm314, %v348, 0.0
  %v353 = vadd.f32 %v351, %v352
  %v354 = vsel %vm314, %v349, 0.0
  %v355 = vadd.f32 %v353, %v354
  %v356 = vsel %vm314, %v350, 0.0
  %v357 = vadd.f32 %v355, %v356
  %v358 = vrot.slane %v357, 4
  %v359 = vadd.f32 %v357, %v358
  %v360 = vrot.slane %v359, 2
  %v361 = vadd.f32 %v359, %v360
  %v362 = vrot.slane %v361, 1
  %v363 = vadd.f32 %v361, %v362
  %365 = vrot.lane.b32.xlu0 %v363, 120
  %v366 = vpop.permute.xlu0 %365
  %v368 = vadd.f32 %v363, %v366
  %v369 = vmul.f32 %v368, 0.015625
  %371 = vrot.lane.b32.xlu0 %v369, 8
  %v372 = vpop.permute.xlu0 %371
  %v374 = vsel %vm216, %v369, %v372
  %v375 = vadd.f32 %v374, 1e-05
  %v376 = vrsqrt.pop %v375
  %v377 = vlaneseq
  %v378 = vshrl.u32 %v377, 7
  %v379 = vsub.s32 0, %v378
  %v380 = vrot.slane %v376, %v379
  %v381 = vmul.f32 %v343, %v380
  %v382 = vmul.f32 %v344, %v380
  %v383 = vmul.f32 %v345, %v380
  %v384 = vmul.f32 %v346, %v380
  %v385 = vld [vmem:[%s5] sm:$0x1]
  %v387 = vlaneseq
  %v388 = vshrl.u32 %v387, 7
  %v389 = vsub.s32 0, %v388
  %v390 = vrot.slane %v385, %v389
  %v392 = vmul.f32 %v381, %v390
  %v393 = vmul.f32 %v382, %v390
  %v394 = vmul.f32 %v383, %v390
  %v395 = vmul.f32 %v384, %v390
  %v396 = vld [vmem:[%s6] sm:$0x1]
  %v398 = vlaneseq
  %v399 = vshrl.u32 %v398, 7
  %v400 = vsub.s32 0, %v399
  %v401 = vrot.slane %v396, %v400
  %v403 = vadd.f32 %v392, %v401
  %v404 = vadd.f32 %v393, %v401
  %v405 = vadd.f32 %v394, %v401
  %v406 = vadd.f32 %v395, %v401
  %v407 = vmax.f32 %v403, 0.0
  %v408 = vmax.f32 %v404, 0.0
  %v409 = vmax.f32 %v405, 0.0
  %v410 = vmax.f32 %v406, 0.0
  %v411 = vrot.slane %v407, 7
  %v412 = vrot.slane %v408, 7
  %v413 = vrot.slane %v409, 7
  %v414 = vrot.slane %v410, 7
  %vm415 = vcmp.lt.s32.totalorder %v107, 1
  %v416 = vsel %vm415, %v413, %v414
  %v417 = vsel %vm415, %v412, %v413
  %v418 = vsel %vm415, %v411, %v412
  %v419 = vsel %vm415, %v414, %v411
  %v420 = vsel %vm159, 1, 0
  %v421 = vsel %vm160, 1, 0
  %v422 = vsel %vm161, 1, 0
  %v423 = vsel %vm162, 1, 0
  %vm424 = vcmp.eq.s32.totalorder %v420, 1
  %vm425 = vcmp.eq.s32.totalorder %v421, 1
  %vm426 = vcmp.eq.s32.totalorder %v422, 1
  %vm427 = vcmp.eq.s32.totalorder %v423, 1
  %v428 = vsel %vm424, 0.0, %v419
  %v429 = vsel %vm425, 0.0, %v418
  %v430 = vsel %vm426, 0.0, %v417
  %v431 = vsel %vm427, 0.0, %v416
  %v432 = vrot.slane %v407, 1
  %v433 = vrot.slane %v408, 1
  %v434 = vrot.slane %v409, 1
  %v435 = vrot.slane %v410, 1
  %v436 = vsel %vm171, %v434, %v435
  %v437 = vsel %vm171, %v433, %v434
  %v438 = vsel %vm171, %v432, %v433
  %v439 = vsel %vm171, %v435, %v432
  %v440 = vsel %vm180, 0.0, %v438
  %v441 = vsel %vm181, 0.0, %v437
  %v442 = vsel %vm182, 0.0, %v436
  %v443 = vsel %vm183, 0.0, %v439
  %448 = vrot.lane.b32.xlu0 %v407, 16
  %v449 = vpop.permute.xlu0 %448
  %450 = vrot.lane.b32.xlu0 %v408, 16
  %v451 = vpop.permute.xlu0 %450
  %452 = vrot.lane.b32.xlu0 %v409, 16
  %v453 = vpop.permute.xlu0 %452
  %454 = vrot.lane.b32.xlu0 %v410, 16
  %v455 = vpop.permute.xlu0 %454
  %464 = vrot.lane.b32.xlu0 %v440, 32
  %v465 = vpop.permute.xlu0 %464
  %466 = vrot.lane.b32.xlu0 %v441, 32
  %v467 = vpop.permute.xlu0 %466
  %468 = vrot.lane.b32.xlu0 %v442, 32
  %v469 = vpop.permute.xlu0 %468
  %470 = vrot.lane.b32.xlu0 %v443, 32
  %v471 = vpop.permute.xlu0 %470
  %v476 = vsel %vm314, %v428, %v449
  %v477 = vsel %vm314, %v429, %v451
  %v478 = vsel %vm314, %v430, %v453
  %v479 = vsel %vm314, %v431, %v455
  %vm480 = vcmask 261120
  %v481 = vsel %vm480, %v476, %v465
  %v482 = vsel %vm480, %v477, %v467
  %v483 = vsel %vm480, %v478, %v469
  %v484 = vsel %vm480, %v479, %v471
  %v485 = vld [vmem:[%s7] sm:$0xff]
  %v486 = vld [vmem:[%s7 + $0x8] sm:$0xff]
  %v487 = vld [vmem:[%s7 + $0x10] sm:$0xff]
  %v488 = vld [vmem:[%s7 + $0x18] sm:$0xff]
  %v489 = vld [vmem:[%s7 + $0x20] sm:$0xff]
  %v490 = vld [vmem:[%s7 + $0x28] sm:$0xff]
  %v491 = vld [vmem:[%s8] sm:$0x1]
  %v493 = vlaneseq
  %v494 = vshrl.u32 %v493, 7
  %v495 = vsub.s32 0, %v494
  %v496 = vrot.slane %v491, %v495
  %vm498 = vcmask 392192
  %v500 = vsel %vm498, %v481, 0
  %v503 = vsel %vm498, %v482, 0
  %v506 = vsel %vm498, %v483, 0
  %v509 = vsel %vm498, %v484, 0
  %511 = vmatprep.subr.mxu0 0.0
  %512 = vmatpush1.msra.mxu0 %v485
  %513 = vmatprep.subr.mxu0 0.0
  %514 = vmatpush1.msra.mxu0 %v486
  %515 = vmatprep.subr.mxu0 0.0
  %516 = vmatpush1.msra.mxu0 %v487
  %517 = vmatprep.subr.mxu0 0.0
  %518 = vmatpush1.msra.mxu0 %v488
  %519 = vmatprep.subr.mxu0 0.0
  %520 = vmatpush1.msra.mxu0 %v489
  %521 = vmatprep.subr.mxu0 0.0
  %522 = vmatpush1.msra.mxu0 %v490
  %523 = vmatprep.subr.mxu0 0.0
  %524 = vmatpush1.msra.mxu0 0.0
  %525 = vmatprep.subr.mxu0 0.0
  %526 = vmatpush1.msra.mxu0 0.0
  %527 = vmatprep.subr.mxu0 0.0
  %528 = vmatpush1.msra.mxu0 0.0
  %529 = vmatprep.subr.mxu0 0.0
  %530 = vmatpush1.msra.mxu0 0.0
  %531 = vmatprep.subr.mxu0 0.0
  %532 = vmatpush1.msra.mxu0 0.0
  %533 = vmatprep.subr.mxu0 0.0
  %534 = vmatpush1.msra.mxu0 0.0
  %535 = vmatprep.subr.mxu0 0.0
  %536 = vmatpush1.msra.mxu0 0.0
  %537 = vmatprep.subr.mxu0 0.0
  %538 = vmatpush1.msra.mxu0 0.0
  %539 = vmatprep.subr.mxu0 0.0
  %540 = vmatpush1.msra.mxu0 0.0
  %541 = vmatprep.subr.mxu0 0.0
  %542 = vmatpush1.msra.mxu0 0.0
  %543 = vmatprep.subr.mxu0 0.0
  %544 = vmatpush1.msra.mxu0 0.0
  %545 = vmatprep.subr.mxu0 0.0
  %546 = vmatpush1.msra.mxu0 0.0
  %547 = vmatprep.subr.mxu0 0.0
  %548 = vmatpush1.msra.mxu0 0.0
  %549 = vmatprep.subr.mxu0 0.0
  %550 = vmatpush1.msra.mxu0 0.0
  %551 = vmatprep.subr.mxu0 0.0
  %552 = vmatpush1.msra.mxu0 0.0
  %553 = vmatprep.subr.mxu0 0.0
  %554 = vmatpush1.msra.mxu0 0.0
  %555 = vmatprep.subr.mxu0 0.0
  %556 = vmatpush1.msra.mxu0 0.0
  %557 = vmatprep.subr.mxu0 0.0
  %558 = vmatpush1.msra.mxu0 0.0
  %559 = vmatprep.subr.mxu0 0.0
  %560 = vmatpush1.msra.mxu0 0.0
  %561 = vmatprep.subr.mxu0 0.0
  %562 = vmatpush1.msra.mxu0 0.0
  %563 = vmatprep.subr.mxu0 0.0
  %564 = vmatpush1.msra.mxu0 0.0
  %565 = vmatprep.subr.mxu0 0.0
  %566 = vmatpush1.msra.mxu0 0.0
  %567 = vmatprep.subr.mxu0 0.0
  %568 = vmatpush1.msra.mxu0 0.0
  %569 = vmatprep.subr.mxu0 0.0
  %570 = vmatpush1.msra.mxu0 0.0
  %571 = vmatprep.subr.mxu0 0.0
  %572 = vmatpush1.msra.mxu0 0.0
  %573 = vmatprep.subr.mxu0 0.0
  %574 = vmatpush1.msra.mxu0 0.0
  %575 = vmatprep.mubr.f32.mxu0 0.0
  %576 = vmatmul.mubr.f32.gmra.mrb[0].mxu0 %v500
  %v577 = vpop.f32.mrb[0].mxu0
  %v578 = vadd.f32 %v496, %v577
  %v579 = vpop.f32.mrb[0].mxu0
  %580 = vmatprep.mubr.f32.mxu0 0.0
  %581 = vmatmul.mubr.f32.gmra.mrb[0].mxu0 %v503
  %v582 = vpop.f32.mrb[0].mxu0
  %v583 = vadd.f32 %v496, %v582
  %v584 = vpop.f32.mrb[0].mxu0
  %585 = vmatprep.mubr.f32.mxu0 0.0
  %586 = vmatmul.mubr.f32.gmra.mrb[0].mxu0 %v506
  %v587 = vpop.f32.mrb[0].mxu0
  %v588 = vadd.f32 %v496, %v587
  %v589 = vpop.f32.mrb[0].mxu0
  %590 = vmatprep.mubr.f32.mxu0 0.0
  %591 = vmatmul.mubr.f32.gmra.mrb[0].mxu0 %v509
  %v592 = vpop.f32.mrb[0].mxu0
  %v593 = vadd.f32 %v496, %v592
  %v594 = vpop.f32.mrb[0].mxu0
  %595 = vdwg.mxu0
  %v596 = vadd.f32 %v578, %v407
  %v597 = vadd.f32 %v583, %v408
  %v598 = vadd.f32 %v588, %v409
  %v599 = vadd.f32 %v593, %v410
  %600 = vst.msk [vmem:[%s9] sm:$0xff] %vm314, %v596
  %601 = vst.msk [vmem:[%s9 + $0x8] sm:$0xff] %vm314, %v597
  %602 = vst.msk [vmem:[%s9 + $0x10] sm:$0xff] %vm314, %v598
  %603 = vst.msk [vmem:[%s9 + $0x18] sm:$0xff] %vm314, %v599
  // Predicated region
  $region38: #{trancnn_block_forward.1} parent=0 // pred_check
    _
  $region39: #{trancnn_block_forward.1} parent=0 // pred_check_branch
    %605 = sbr.rel (0) target = $region41
  $region40: #{trancnn_block_forward.1} parent=0 // pred_region
    _
  $region41: #{trancnn_block_forward.1} parent=0 // pred_fallthru
    _
  // Predicated region
  $region42: #{trancnn_block_forward.1} parent=0 // pred_check
    _
  $region43: #{trancnn_block_forward.1} parent=0 // pred_check_branch
    %607 = sbr.rel (0) target = $region45
  $region44: #{trancnn_block_forward.1} parent=0 // pred_region
    _
  $region45: #{trancnn_block_forward.1} parent=0 // pred_fallthru
    _

</llo_original>
